<compile_context>
chip_gen: v7x
topology: tpu7x:2x2x1
jax: 0.10.0
libtpu: 0.0.40
codegen_flags: <defaults>
</compile_context>

<pallas_src>
from functools import partial

import jax
import jax.numpy as jnp
from jax.experimental import pallas as pl
from jax.experimental.pallas import tpu as pltpu


# ---------------------------------------------------------------------------
# Kernel
# ---------------------------------------------------------------------------
def _ensemble_fused_kernel(x_ref, w1_ref, b1_ref, w2_ref, b2_ref, o_ref):
    # Hidden layer for ALL ensemble members at once (MXU, f32 accumulate).
    h = jnp.dot(x_ref[...], w1_ref[...], preferred_element_type=jnp.float32)
    # Bias + ReLU in f32 (safe on v5e's f32-only VPU).
    h = jnp.maximum(h + b1_ref[...], 0.0)
    # Cast to the compute dtype only right before the second matmul.
    h = h.astype(w2_ref.dtype)
    # Second layer; the 1/E ensemble mean is already folded into W2_cat/b2_mean.
    y = jnp.dot(h, w2_ref[...], preferred_element_type=jnp.float32)
    o_ref[...] = (y + b2_ref[...]).astype(o_ref.dtype)


# ---------------------------------------------------------------------------
# One-time parameter preparation (do this at init time, NOT per forward call)
# ---------------------------------------------------------------------------
def prepare_fused_params(w1, b1, w2, b2, compute_dtype=jnp.float32):
    """w1: [E, D_in, H]; b1: [E, H]; w2: [E, H, D_out]; b2: [E, D_out]."""
    E, D_in, H = w1.shape
    D_out = w2.shape[-1]
    EH = E * H
    EH_pad = ((EH + 127) // 128) * 128  # lane-multiple padding (320 -> 384)

    # Member-major grouping on the hidden axis matches b1.reshape(E*H) and
    # w2.reshape(E*H, D_out).
    w1_cat = jnp.transpose(w1, (1, 0, 2)).reshape(D_in, EH)        # [D_in, E*H]
    b1_cat = b1.reshape(1, EH).astype(jnp.float32)                  # [1, E*H]
    w2_cat = w2.reshape(EH, D_out) * (1.0 / E)                      # mean folded in
    b2_mean = jnp.mean(b2.astype(jnp.float32), axis=0, keepdims=True)  # [1, D_out]

    if EH_pad != EH:
        pad = EH_pad - EH
        w1_cat = jnp.pad(w1_cat, ((0, 0), (0, pad)))   # zero cols -> h_pad = 0
        b1_cat = jnp.pad(b1_cat, ((0, 0), (0, pad)))   # zero bias -> ReLU(0) = 0
        w2_cat = jnp.pad(w2_cat, ((0, pad), (0, 0)))   # zero rows -> no contribution

    w1_cat = w1_cat.astype(compute_dtype)
    w2_cat = w2_cat.astype(compute_dtype)
    return w1_cat, b1_cat, w2_cat, b2_mean


def _choose_block_b(B, cap=1024):
    if B <= cap:
        return B
    # Large batch: keep >= 2 grid steps (v7x has 2 TCs) and stay sublane-aligned.
    bb = min(cap, pl.cdiv(B, 2))
    return max(8, (bb // 8) * 8)


# ---------------------------------------------------------------------------
# Forward (jitted; only the pallas_call is on the per-call path)
# ---------------------------------------------------------------------------
@jax.jit
def deep_ensemble_forward(x, w1_cat, b1_cat, w2_cat, b2_mean):
    """x: [B, D_in] (f32 or bf16); fused params from prepare_fused_params."""
    B, D_in = x.shape
    EHp = w1_cat.shape[1]
    D_out = w2_cat.shape[1]

    block_b = _choose_block_b(B)
    grid = (pl.cdiv(B, block_b),)

    return pl.pallas_call(
        _ensemble_fused_kernel,
        out_shape=jax.ShapeDtypeStruct((B, D_out), jnp.float32),
        grid_spec=pl.GridSpec(
            grid=grid,
            in_specs=[
                pl.BlockSpec((block_b, D_in), lambda i: (i, 0)),  # x batch tile
                pl.BlockSpec((D_in, EHp), lambda i: (0, 0)),      # W1_cat (resident)
                pl.BlockSpec((1, EHp), lambda i: (0, 0)),         # b1_cat (resident)
                pl.BlockSpec((EHp, D_out), lambda i: (0, 0)),     # W2_cat (resident)
                pl.BlockSpec((1, D_out), lambda i: (0, 0)),       # b2_mean (resident)
            ],
            out_specs=pl.BlockSpec((block_b, D_out), lambda i: (i, 0)),
        ),
        compiler_params=pltpu.CompilerParams(
            dimension_semantics=("parallel",),  # batch axis -> v7x 2-TC sharding
        ),
    )(x, w1_cat, b1_cat, w2_cat, b2_mean)


# ---------------------------------------------------------------------------
# Pure-JAX reference of the original module (per-member MLP, stack, mean)
# ---------------------------------------------------------------------------
def _reference(x, w1, b1, w2, b2):
    h = jnp.maximum(jnp.einsum("bd,edh->ebh", x, w1) + b1[:, None, :], 0.0)
    y = jnp.einsum("ebh,eho->ebo", h, w2) + b2[:, None, :]
    return jnp.mean(y, axis=0)


if __name__ == "__main__":
    n_model = 5
    B, D_in, H, D_out = 8, 32, 64, 16

    key = jax.random.PRNGKey(0)
    kx, k1, k2, k3, k4 = jax.random.split(key, 5)

    x = jax.random.normal(kx, (B, D_in), dtype=jnp.float32)
    # NOTE: the PyTorch reference appends the *same* model object n_model
    # times, so all members share weights; distinct weights are used here to
    # exercise the ensemble reduction — the stack/mean semantics are identical.
    w1 = jax.random.normal(k1, (n_model, D_in, H), dtype=jnp.float32) * 0.1
    b1 = jax.random.normal(k2, (n_model, H), dtype=jnp.float32) * 0.1
    w2 = jax.random.normal(k3, (n_model, H, D_out), dtype=jnp.float32) * 0.1
    b2 = jax.random.normal(k4, (n_model, D_out), dtype=jnp.float32) * 0.1

    ref = _reference(x, w1, b1, w2, b2)

    # --- f32 path (exact vs reference up to f32 summation order) ------------
    fused_f32 = prepare_fused_params(w1, b1, w2, b2, jnp.float32)  # one-time prep
    out = jax.block_until_ready(deep_ensemble_forward(x, *fused_f32))
    assert out.shape == (B, D_out)
    assert jnp.allclose(out, ref, atol=1e-5, rtol=1e-5), "f32 mismatch vs reference"

    # --- bf16 compute path (v6e/v7x MXU + half the DMA bytes) ---------------
    fused_bf16 = prepare_fused_params(w1, b1, w2, b2, jnp.bfloat16)
    out_bf16 = jax.block_until_ready(
        deep_ensemble_forward(x.astype(jnp.bfloat16), *fused_bf16)
    )
    assert out_bf16.shape == (B, D_out)
    assert jnp.allclose(out_bf16, ref, atol=5e-2, rtol=5e-2), "bf16 mismatch vs reference"

    # TODO(synk): kl_loss() depends on the (unspecified) base model's kl_loss(); not implemented.
    print("KERNEL_OK")
</pallas_src>

<mosaic_0001>
module attributes {stable_mosaic.version = 11 : i64} {
  func.func @_ensemble_fused_kernel(%arg0: i32, %arg1: memref<8x32xf32, #tpu.memory_space<vmem>>, %arg2: memref<32x384xf32, #tpu.memory_space<vmem>>, %arg3: memref<1x384xf32, #tpu.memory_space<vmem>>, %arg4: memref<384x16xf32, #tpu.memory_space<vmem>>, %arg5: memref<1x16xf32, #tpu.memory_space<vmem>>, %arg6: memref<8x16xf32, #tpu.memory_space<vmem>>) attributes {dimension_semantics = [#tpu.dimension_semantics<parallel>], iteration_bounds = array<i64: 1>, scalar_prefetch = 0 : i64, scratch_operands = 0 : i64, tpu.core_type = #tpu.core_type<tc>, window_params = [{transform_indices = @transform_0, window_bounds = array<i64: 8, 32>}, {pipeline_mode = #tpu.pipeline_mode<synchronous>, transform_indices = @transform_1, window_bounds = array<i64: 32, 384>}, {pipeline_mode = #tpu.pipeline_mode<synchronous>, transform_indices = @transform_2, window_bounds = array<i64: 1, 384>}, {pipeline_mode = #tpu.pipeline_mode<synchronous>, transform_indices = @transform_3, window_bounds = array<i64: 384, 16>}, {pipeline_mode = #tpu.pipeline_mode<synchronous>, transform_indices = @transform_4, window_bounds = array<i64: 1, 16>}, {transform_indices = @transform_5, window_bounds = array<i64: 8, 16>}]} {
    %c0 = arith.constant 0 : index
    %c0_0 = arith.constant 0 : index
    %0 = vector.load %arg1[%c0, %c0_0] : memref<8x32xf32, #tpu.memory_space<vmem>>, vector<8x32xf32>
    %c0_1 = arith.constant 0 : index
    %c0_2 = arith.constant 0 : index
    %1 = vector.load %arg2[%c0_1, %c0_2] : memref<32x384xf32, #tpu.memory_space<vmem>>, vector<32x384xf32>
    %cst = arith.constant dense<0.000000e+00> : vector<8x384xf32>
    %2 = tpu.matmul %0, %1, %cst {dimension_numbers = #tpu.dot_dimension_numbers<[1], [0], [0], [1], [0, 0, 1, 1], [], []>} : vector<8x32xf32>, vector<32x384xf32>, vector<8x384xf32> -> vector<8x384xf32>
    %c0_3 = arith.constant 0 : index
    %c0_4 = arith.constant 0 : index
    %3 = vector.load %arg3[%c0_3, %c0_4] : memref<1x384xf32, #tpu.memory_space<vmem>>, vector<1x384xf32>
    %4 = vector.broadcast %3 : vector<1x384xf32> to vector<8x384xf32>
    %5 = arith.addf %2, %4 : vector<8x384xf32>
    %cst_5 = arith.constant 0.000000e+00 : f32
    %6 = vector.broadcast %cst_5 : f32 to vector<8x384xf32>
    %7 = arith.maximumf %5, %6 : vector<8x384xf32>
    %c0_6 = arith.constant 0 : index
    %c0_7 = arith.constant 0 : index
    %8 = vector.load %arg4[%c0_6, %c0_7] : memref<384x16xf32, #tpu.memory_space<vmem>>, vector<384x16xf32>
    %cst_8 = arith.constant dense<0.000000e+00> : vector<8x16xf32>
    %9 = tpu.matmul %7, %8, %cst_8 {dimension_numbers = #tpu.dot_dimension_numbers<[1], [0], [0], [1], [0, 0, 1, 1], [], []>} : vector<8x384xf32>, vector<384x16xf32>, vector<8x16xf32> -> vector<8x16xf32>
    %c0_9 = arith.constant 0 : index
    %c0_10 = arith.constant 0 : index
    %10 = vector.load %arg5[%c0_9, %c0_10] : memref<1x16xf32, #tpu.memory_space<vmem>>, vector<1x16xf32>
    %11 = vector.broadcast %10 : vector<1x16xf32> to vector<8x16xf32>
    %12 = arith.addf %9, %11 : vector<8x16xf32>
    %c0_11 = arith.constant 0 : index
    %c0_12 = arith.constant 0 : index
    %13 = vector.load %arg6[%c0_11, %c0_12] : memref<8x16xf32, #tpu.memory_space<vmem>>, vector<8x16xf32>
    tpu.vector_store %arg6[%c0_11, %c0_12], %12 {strides = array<i32>} : memref<8x16xf32, #tpu.memory_space<vmem>>, vector<8x16xf32>,
    return
  }
  func.func @transform_0(%arg0: i32) -> (i32, i32) {
    %c0_i32 = arith.constant 0 : i32
    %c0_i32_0 = arith.constant 0 : i32
    return %arg0, %c0_i32 : i32, i32
  }
  func.func @transform_1(%arg0: i32) -> (i32, i32) {
    %c0_i32 = arith.constant 0 : i32
    %c0_i32_0 = arith.constant 0 : i32
    %c0_i32_1 = arith.constant 0 : i32
    return %c0_i32, %c0_i32_0 : i32, i32
  }
  func.func @transform_2(%arg0: i32) -> (i32, i32) {
    %c0_i32 = arith.constant 0 : i32
    %c0_i32_0 = arith.constant 0 : i32
    %c0_i32_1 = arith.constant 0 : i32
    return %c0_i32, %c0_i32_0 : i32, i32
  }
  func.func @transform_3(%arg0: i32) -> (i32, i32) {
    %c0_i32 = arith.constant 0 : i32
    %c0_i32_0 = arith.constant 0 : i32
    %c0_i32_1 = arith.constant 0 : i32
    return %c0_i32, %c0_i32_0 : i32, i32
  }
  func.func @transform_4(%arg0: i32) -> (i32, i32) {
    %c0_i32 = arith.constant 0 : i32
    %c0_i32_0 = arith.constant 0 : i32
    %c0_i32_1 = arith.constant 0 : i32
    return %c0_i32, %c0_i32_0 : i32, i32
  }
  func.func @transform_5(%arg0: i32) -> (i32, i32) {
    %c0_i32 = arith.constant 0 : i32
    %c0_i32_0 = arith.constant 0 : i32
    return %arg0, %c0_i32 : i32, i32
  }
}

</mosaic_0001>

<llo_original>
// kernel: deep_ensemble_forward.1
$region0: #{deep_ensemble_forward.1}
  #allocation0 [shape = 'u32[]', space=smem, size = 0x4, offset = 0x4, fixed_abs, tag = 'smem constant byte address 0x4 - core index']
  #allocation1 [shape = 'u32[144,128]{1,0:T(1,128)}', space=vmem, size = 0x12000, scoped, tag = 'internal scratch']
  %s0 = inlined_call_operand.vmem [shape: f32[8,32], index: 0, kind: input, shape index: {}]
  %s1 = inlined_call_operand.vmem [shape: f32[32,384], index: 1, kind: input, shape index: {}]
  %s2 = inlined_call_operand.vmem [shape: f32[1,384], index: 2, kind: input, shape index: {}]
  %s3 = inlined_call_operand.vmem [shape: f32[384,16], index: 3, kind: input, shape index: {}]
  %s4 = inlined_call_operand.vmem [shape: f32[1,16], index: 4, kind: input, shape index: {}]
  %s5 = inlined_call_operand.hbm [shape: f32[8,16], index: 5, kind: output, shape index: {}]
  %s6 = sld [smem:[#allocation0]]
  $region30: #{deep_ensemble_forward.1} parent=0
    _
  %s8 = ssub.s32 1, %s6
  %s9 = scalar_select 0, %s8, %s6
  $region1: #{deep_ensemble_forward.1} parent=0
    #allocation2 [shape = 'u8[4096]{0}', space=vmem, size = 0x1000, scoped, tag = 'output window, operand 0, single buffered']
    #allocation3 [shape = 's32[1]{0}', space=sflag, size = 0x4, scoped, tag = 'scoped memory for deep_ensemble_forward.1']
    %10 = vsyncpa [#allocation3], 0
    // Predicated region
    $region2: #{deep_ensemble_forward.1} parent=1 // pred_check
      _
    $region3: #{deep_ensemble_forward.1} parent=1 // pred_check_branch
      %12 = sbr.rel (0) target = $region5
    $region4: #{deep_ensemble_forward.1} parent=1 // pred_region
      _
    $region5: #{deep_ensemble_forward.1} parent=1 // pred_fallthru
      _
    // Predicated region
    $region6: #{deep_ensemble_forward.1} parent=1 // pred_check
      _
    $region7: #{deep_ensemble_forward.1} parent=1 // pred_check_branch
      %14 = sbr.rel (0) target = $region9
    $region8: #{deep_ensemble_forward.1} parent=1 // pred_region
      _
    $region9: #{deep_ensemble_forward.1} parent=1 // pred_fallthru
      _
    // Predicated region
    $region10: #{deep_ensemble_forward.1} parent=1 // pred_check
      _
    $region11: #{deep_ensemble_forward.1} parent=1 // pred_check_branch
      %16 = sbr.rel (0) target = $region13
    $region12: #{deep_ensemble_forward.1} parent=1 // pred_region
      _
    $region13: #{deep_ensemble_forward.1} parent=1 // pred_fallthru
      _
    // Predicated region
    $region14: #{deep_ensemble_forward.1} parent=1 // pred_check
      _
    $region15: #{deep_ensemble_forward.1} parent=1 // pred_check_branch
      %18 = sbr.rel (0) target = $region17
    $region16: #{deep_ensemble_forward.1} parent=1 // pred_region
      _
    $region17: #{deep_ensemble_forward.1} parent=1 // pred_fallthru
      _
    // Predicated region
    $region18: #{deep_ensemble_forward.1} parent=1 // pred_check
      _
    $region19: #{deep_ensemble_forward.1} parent=1 // pred_check_branch
      %20 = sbr.rel (0) target = $region21
    $region20: #{deep_ensemble_forward.1} parent=1 // pred_region
      _
    $region21: #{deep_ensemble_forward.1} parent=1 // pred_fallthru
      _
    %v21 = vld [vmem:[%s0] sm:$0xff]
    %v22 = vld [vmem:[%s1] sm:$0xff]
    %v23 = vld [vmem:[%s1 + $0x8] sm:$0xff]
    %v24 = vld [vmem:[%s1 + $0x10] sm:$0xff]
    %v25 = vld [vmem:[%s1 + $0x18] sm:$0xff]
    %v26 = vld [vmem:[%s1 + $0x20] sm:$0xff]
    %v27 = vld [vmem:[%s1 + $0x28] sm:$0xff]
    %v28 = vld [vmem:[%s1 + $0x30] sm:$0xff]
    %v29 = vld [vmem:[%s1 + $0x38] sm:$0xff]
    %v30 = vld [vmem:[%s1 + $0x40] sm:$0xff]
    %v31 = vld [vmem:[%s1 + $0x48] sm:$0xff]
    %v32 = vld [vmem:[%s1 + $0x50] sm:$0xff]
    %v33 = vld [vmem:[%s1 + $0x58] sm:$0xff]
    %v34 = vld [vmem:[%s2] sm:$0x7]
    %v36 = vlaneseq
    %v37 = vshrl.u32 %v36, 7
    %v38 = vsub.s32 0, %v37
    %v39 = vrot.slane %v34, %v38
    %v40 = vlaneseq
    %v41 = vshrl.u32 %v40, 7
    %v42 = vsub.s32 1, %v41
    %v43 = vrot.slane %v34, %v42
    %v44 = vlaneseq
    %v45 = vshrl.u32 %v44, 7
    %v46 = vsub.s32 2, %v45
    %v47 = vrot.slane %v34, %v46
    %vm51 = vcmask 261120
    %v53 = vsel %vm51, %v21, 0
    %55 = vmatprep.subr.mxu0 %v23
    %56 = vmatpush1.msra.mxu0 %v22
    %57 = vmatprep.subr.mxu0 %v26
    %58 = vmatpush1.msra.mxu0 %v25
    %59 = vmatprep.subr.mxu0 %v29
    %60 = vmatpush1.msra.mxu0 %v28
    %61 = vmatprep.subr.mxu0 %v32
    %62 = vmatpush1.msra.mxu0 %v31
    %63 = vmatprep.subr.mxu0 0.0
    %64 = vmatpush1.msra.mxu0 0.0
    %65 = vmatprep.subr.mxu0 0.0
    %66 = vmatpush1.msra.mxu0 0.0
    %67 = vmatprep.subr.mxu0 0.0
    %68 = vmatpush1.msra.mxu0 0.0
    %69 = vmatprep.subr.mxu0 0.0
    %70 = vmatpush1.msra.mxu0 0.0
    %71 = vmatprep.subr.mxu0 0.0
    %72 = vmatpush1.msra.mxu0 0.0
    %73 = vmatprep.subr.mxu0 0.0
    %74 = vmatpush1.msra.mxu0 0.0
    %75 = vmatprep.subr.mxu0 0.0
    %76 = vmatpush1.msra.mxu0 0.0
    %77 = vmatprep.subr.mxu0 0.0
    %78 = vmatpush1.msra.mxu0 0.0
    %79 = vmatprep.subr.mxu0 0.0
    %80 = vmatpush1.msra.mxu0 0.0
    %81 = vmatprep.subr.mxu0 0.0
    %82 = vmatpush1.msra.mxu0 0.0
    %83 = vmatprep.subr.mxu0 0.0
    %84 = vmatpush1.msra.mxu0 0.0
    %85 = vmatprep.subr.mxu0 0.0
    %86 = vmatpush1.msra.mxu0 0.0
    %87 = vmatprep.subr.mxu0 0.0
    %88 = vmatpush1.msra.mxu0 0.0
    %89 = vmatprep.subr.mxu0 0.0
    %90 = vmatpush1.msra.mxu0 0.0
    %91 = vmatprep.subr.mxu0 0.0
    %92 = vmatpush1.msra.mxu0 0.0
    %93 = vmatprep.subr.mxu0 0.0
    %94 = vmatpush1.msra.mxu0 0.0
    %95 = vmatprep.subr.mxu0 0.0
    %96 = vmatpush1.msra.mxu0 0.0
    %97 = vmatprep.subr.mxu0 0.0
    %98 = vmatpush1.msra.mxu0 0.0
    %99 = vmatprep.subr.mxu0 0.0
    %100 = vmatpush1.msra.mxu0 0.0
    %101 = vmatprep.subr.mxu0 0.0
    %102 = vmatpush1.msra.mxu0 0.0
    %103 = vmatprep.subr.mxu0 0.0
    %104 = vmatpush1.msra.mxu0 0.0
    %105 = vmatprep.subr.mxu0 0.0
    %106 = vmatpush1.msra.mxu0 0.0
    %107 = vmatprep.subr.mxu0 0.0
    %108 = vmatpush1.msra.mxu0 0.0
    %109 = vmatprep.subr.mxu0 0.0
    %110 = vmatpush1.msra.mxu0 0.0
    %111 = vmatprep.subr.mxu0 0.0
    %112 = vmatpush1.msra.mxu0 0.0
    %113 = vmatprep.subr.mxu0 0.0
    %114 = vmatpush1.msra.mxu0 0.0
    %115 = vmatprep.subr.mxu0 0.0
    %116 = vmatpush1.msra.mxu0 0.0
    %117 = vmatprep.subr.mxu0 0.0
    %118 = vmatpush1.msra.mxu0 0.0
    %119 = vmatprep.mubr.f32.mxu0 0.0
    %120 = vmatmul.mubr.f32.gmra.mrb[0].mxu0 %v53
    %v121 = vpop.f32.mrb[0].mxu0
    %v122 = vadd.f32 %v39, %v121
    %v123 = vpop.f32.mrb[0].mxu0
    %v124 = vadd.f32 %v43, %v123
    %125 = vdwg.mxu0
    %126 = vmatprep.subr.mxu0 0.0
    %127 = vmatpush1.msra.mxu0 %v24
    %128 = vmatprep.subr.mxu0 0.0
    %129 = vmatpush1.msra.mxu0 %v27
    %130 = vmatprep.subr.mxu0 0.0
    %131 = vmatpush1.msra.mxu0 %v30
    %132 = vmatprep.subr.mxu0 0.0
    %133 = vmatpush1.msra.mxu0 %v33
    %134 = vmatprep.subr.mxu0 0.0
    %135 = vmatpush1.msra.mxu0 0.0
    %136 = vmatprep.subr.mxu0 0.0
    %137 = vmatpush1.msra.mxu0 0.0
    %138 = vmatprep.subr.mxu0 0.0
    %139 = vmatpush1.msra.mxu0 0.0
    %140 = vmatprep.subr.mxu0 0.0
    %141 = vmatpush1.msra.mxu0 0.0
    %142 = vmatprep.subr.mxu0 0.0
    %143 = vmatpush1.msra.mxu0 0.0
    %144 = vmatprep.subr.mxu0 0.0
    %145 = vmatpush1.msra.mxu0 0.0
    %146 = vmatprep.subr.mxu0 0.0
    %147 = vmatpush1.msra.mxu0 0.0
    %148 = vmatprep.subr.mxu0 0.0
    %149 = vmatpush1.msra.mxu0 0.0
    %150 = vmatprep.subr.mxu0 0.0
    %151 = vmatpush1.msra.mxu0 0.0
    %152 = vmatprep.subr.mxu0 0.0
    %153 = vmatpush1.msra.mxu0 0.0
    %154 = vmatprep.subr.mxu0 0.0
    %155 = vmatpush1.msra.mxu0 0.0
    %156 = vmatprep.subr.mxu0 0.0
    %157 = vmatpush1.msra.mxu0 0.0
    %158 = vmatprep.subr.mxu0 0.0
    %159 = vmatpush1.msra.mxu0 0.0
    %160 = vmatprep.subr.mxu0 0.0
    %161 = vmatpush1.msra.mxu0 0.0
    %162 = vmatprep.subr.mxu0 0.0
    %163 = vmatpush1.msra.mxu0 0.0
    %164 = vmatprep.subr.mxu0 0.0
    %165 = vmatpush1.msra.mxu0 0.0
    %166 = vmatprep.subr.mxu0 0.0
    %167 = vmatpush1.msra.mxu0 0.0
    %168 = vmatprep.subr.mxu0 0.0
    %169 = vmatpush1.msra.mxu0 0.0
    %170 = vmatprep.subr.mxu0 0.0
    %171 = vmatpush1.msra.mxu0 0.0
    %172 = vmatprep.subr.mxu0 0.0
    %173 = vmatpush1.msra.mxu0 0.0
    %174 = vmatprep.subr.mxu0 0.0
    %175 = vmatpush1.msra.mxu0 0.0
    %176 = vmatprep.subr.mxu0 0.0
    %177 = vmatpush1.msra.mxu0 0.0
    %178 = vmatprep.subr.mxu0 0.0
    %179 = vmatpush1.msra.mxu0 0.0
    %180 = vmatprep.subr.mxu0 0.0
    %181 = vmatpush1.msra.mxu0 0.0
    %182 = vmatprep.subr.mxu0 0.0
    %183 = vmatpush1.msra.mxu0 0.0
    %184 = vmatprep.subr.mxu0 0.0
    %185 = vmatpush1.msra.mxu0 0.0
    %186 = vmatprep.subr.mxu0 0.0
    %187 = vmatpush1.msra.mxu0 0.0
    %188 = vmatprep.subr.mxu0 0.0
    %189 = vmatpush1.msra.mxu0 0.0
    %190 = vmatprep.mubr.f32.mxu0 0.0
    %191 = vmatmul.mubr.f32.gmra.mrb[0].mxu0 %v53
    %v192 = vpop.f32.mrb[0].mxu0
    %v193 = vadd.f32 %v47, %v192
    %v194 = vpop.f32.mrb[0].mxu0
    %195 = vdwg.mxu0
    %v196 = vmax.f32 %v122, 0.0
    %v197 = vmax.f32 %v124, 0.0
    %v198 = vmax.f32 %v193, 0.0
    %v199 = vld [vmem:[%s3] sm:$0xff]
    %v200 = vld [vmem:[%s3 + $0x8] sm:$0xff]
    %v201 = vld [vmem:[%s3 + $0x10] sm:$0xff]
    %v202 = vld [vmem:[%s3 + $0x18] sm:$0xff]
    %v203 = vld [vmem:[%s3 + $0x20] sm:$0xff]
    %v204 = vld [vmem:[%s3 + $0x28] sm:$0xff]
    %v205 = vld [vmem:[%s3 + $0x30] sm:$0xff]
    %v206 = vld [vmem:[%s3 + $0x38] sm:$0xff]
    %v207 = vld [vmem:[%s3 + $0x40] sm:$0xff]
    %v208 = vld [vmem:[%s3 + $0x48] sm:$0xff]
    %v209 = vld [vmem:[%s3 + $0x50] sm:$0xff]
    %v210 = vld [vmem:[%s3 + $0x58] sm:$0xff]
    %v211 = vld [vmem:[%s3 + $0x60] sm:$0xff]
    %v212 = vld [vmem:[%s3 + $0x68] sm:$0xff]
    %v213 = vld [vmem:[%s3 + $0x70] sm:$0xff]
    %v214 = vld [vmem:[%s3 + $0x78] sm:$0xff]
    %v215 = vld [vmem:[%s3 + $0x80] sm:$0xff]
    %v216 = vld [vmem:[%s3 + $0x88] sm:$0xff]
    %v217 = vld [vmem:[%s3 + $0x90] sm:$0xff]
    %v218 = vld [vmem:[%s3 + $0x98] sm:$0xff]
    %v219 = vld [vmem:[%s3 + $0xa0] sm:$0xff]
    %v220 = vld [vmem:[%s3 + $0xa8] sm:$0xff]
    %v221 = vld [vmem:[%s3 + $0xb0] sm:$0xff]
    %v222 = vld [vmem:[%s3 + $0xb8] sm:$0xff]
    %v223 = vld [vmem:[%s3 + $0xc0] sm:$0xff]
    %v224 = vld [vmem:[%s3 + $0xc8] sm:$0xff]
    %v225 = vld [vmem:[%s3 + $0xd0] sm:$0xff]
    %v226 = vld [vmem:[%s3 + $0xd8] sm:$0xff]
    %v227 = vld [vmem:[%s3 + $0xe0] sm:$0xff]
    %v228 = vld [vmem:[%s3 + $0xe8] sm:$0xff]
    %v229 = vld [vmem:[%s3 + $0xf0] sm:$0xff]
    %v230 = vld [vmem:[%s3 + $0xf8] sm:$0xff]
    %v231 = vld [vmem:[%s3 + $0x100] sm:$0xff]
    %v232 = vld [vmem:[%s3 + $0x108] sm:$0xff]
    %v233 = vld [vmem:[%s3 + $0x110] sm:$0xff]
    %v234 = vld [vmem:[%s3 + $0x118] sm:$0xff]
    %v235 = vld [vmem:[%s3 + $0x120] sm:$0xff]
    %v236 = vld [vmem:[%s3 + $0x128] sm:$0xff]
    %v237 = vld [vmem:[%s3 + $0x130] sm:$0xff]
    %v238 = vld [vmem:[%s3 + $0x138] sm:$0xff]
    %v239 = vld [vmem:[%s3 + $0x140] sm:$0xff]
    %v240 = vld [vmem:[%s3 + $0x148] sm:$0xff]
    %v241 = vld [vmem:[%s3 + $0x150] sm:$0xff]
    %v242 = vld [vmem:[%s3 + $0x158] sm:$0xff]
    %v243 = vld [vmem:[%s3 + $0x160] sm:$0xff]
    %v244 = vld [vmem:[%s3 + $0x168] sm:$0xff]
    %v245 = vld [vmem:[%s3 + $0x170] sm:$0xff]
    %v246 = vld [vmem:[%s3 + $0x178] sm:$0xff]
    %v247 = vld [vmem:[%s4] sm:$0x1]
    %v249 = vlaneseq
    %v250 = vshrl.u32 %v249, 7
    %v251 = vsub.s32 0, %v250
    %v252 = vrot.slane %v247, %v251
    %254 = vmatprep.subr.mxu0 0.0
    %255 = vmatpush1.msra.mxu0 %v199
    %256 = vmatprep.subr.mxu0 0.0
    %257 = vmatpush1.msra.mxu0 %v200
    %258 = vmatprep.subr.mxu0 0.0
    %259 = vmatpush1.msra.mxu0 %v201
    %260 = vmatprep.subr.mxu0 0.0
    %261 = vmatpush1.msra.mxu0 %v202
    %262 = vmatprep.subr.mxu0 0.0
    %263 = vmatpush1.msra.mxu0 %v203
    %264 = vmatprep.subr.mxu0 0.0
    %265 = vmatpush1.msra.mxu0 %v204
    %266 = vmatprep.subr.mxu0 0.0
    %267 = vmatpush1.msra.mxu0 %v205
    %268 = vmatprep.subr.mxu0 0.0
    %269 = vmatpush1.msra.mxu0 %v206
    %270 = vmatprep.subr.mxu0 0.0
    %271 = vmatpush1.msra.mxu0 %v207
    %272 = vmatprep.subr.mxu0 0.0
    %273 = vmatpush1.msra.mxu0 %v208
    %274 = vmatprep.subr.mxu0 0.0
    %275 = vmatpush1.msra.mxu0 %v209
    %276 = vmatprep.subr.mxu0 0.0
    %277 = vmatpush1.msra.mxu0 %v210
    %278 = vmatprep.subr.mxu0 0.0
    %279 = vmatpush1.msra.mxu0 %v211
    %280 = vmatprep.subr.mxu0 0.0
    %281 = vmatpush1.msra.mxu0 %v212
    %282 = vmatprep.subr.mxu0 0.0
    %283 = vmatpush1.msra.mxu0 %v213
    %284 = vmatprep.subr.mxu0 0.0
    %285 = vmatpush1.msra.mxu0 %v214
    %286 = vmatprep.subr.mxu0 0.0
    %287 = vmatpush1.msra.mxu0 %v215
    %288 = vmatprep.subr.mxu0 0.0
    %289 = vmatpush1.msra.mxu0 %v216
    %290 = vmatprep.subr.mxu0 0.0
    %291 = vmatpush1.msra.mxu0 %v217
    %292 = vmatprep.subr.mxu0 0.0
    %293 = vmatpush1.msra.mxu0 %v218
    %294 = vmatprep.subr.mxu0 0.0
    %295 = vmatpush1.msra.mxu0 %v219
    %296 = vmatprep.subr.mxu0 0.0
    %297 = vmatpush1.msra.mxu0 %v220
    %298 = vmatprep.subr.mxu0 0.0
    %299 = vmatpush1.msra.mxu0 %v221
    %300 = vmatprep.subr.mxu0 0.0
    %301 = vmatpush1.msra.mxu0 %v222
    %302 = vmatprep.subr.mxu0 0.0
    %303 = vmatpush1.msra.mxu0 %v223
    %304 = vmatprep.subr.mxu0 0.0
    %305 = vmatpush1.msra.mxu0 %v224
    %306 = vmatprep.subr.mxu0 0.0
    %307 = vmatpush1.msra.mxu0 %v225
    %308 = vmatprep.subr.mxu0 0.0
    %309 = vmatpush1.msra.mxu0 %v226
    %310 = vmatprep.subr.mxu0 0.0
    %311 = vmatpush1.msra.mxu0 %v227
    %312 = vmatprep.subr.mxu0 0.0
    %313 = vmatpush1.msra.mxu0 %v228
    %314 = vmatprep.subr.mxu0 0.0
    %315 = vmatpush1.msra.mxu0 %v229
    %316 = vmatprep.subr.mxu0 0.0
    %317 = vmatpush1.msra.mxu0 %v230
    %318 = vmatprep.mubr.f32.mxu0 %v197
    %319 = vmatmul.mubr.f32.gmra.mrb[0].mxu0 %v196
    %v320 = vpop.f32.mrb[0].mxu0
    %v321 = vadd.f32 %v252, %v320
    %v322 = vpop.f32.mrb[0].mxu0
    %323 = vdwg.mxu0
    %324 = vmatprep.subr.mxu0 0.0
    %325 = vmatpush1.msra.mxu0 %v231
    %326 = vmatprep.subr.mxu0 0.0
    %327 = vmatpush1.msra.mxu0 %v232
    %328 = vmatprep.subr.mxu0 0.0
    %329 = vmatpush1.msra.mxu0 %v233
    %330 = vmatprep.subr.mxu0 0.0
    %331 = vmatpush1.msra.mxu0 %v234
    %332 = vmatprep.subr.mxu0 0.0
    %333 = vmatpush1.msra.mxu0 %v235
    %334 = vmatprep.subr.mxu0 0.0
    %335 = vmatpush1.msra.mxu0 %v236
    %336 = vmatprep.subr.mxu0 0.0
    %337 = vmatpush1.msra.mxu0 %v237
    %338 = vmatprep.subr.mxu0 0.0
    %339 = vmatpush1.msra.mxu0 %v238
    %340 = vmatprep.subr.mxu0 0.0
    %341 = vmatpush1.msra.mxu0 %v239
    %342 = vmatprep.subr.mxu0 0.0
    %343 = vmatpush1.msra.mxu0 %v240
    %344 = vmatprep.subr.mxu0 0.0
    %345 = vmatpush1.msra.mxu0 %v241
    %346 = vmatprep.subr.mxu0 0.0
    %347 = vmatpush1.msra.mxu0 %v242
    %348 = vmatprep.subr.mxu0 0.0
    %349 = vmatpush1.msra.mxu0 %v243
    %350 = vmatprep.subr.mxu0 0.0
    %351 = vmatpush1.msra.mxu0 %v244
    %352 = vmatprep.subr.mxu0 0.0
    %353 = vmatpush1.msra.mxu0 %v245
    %354 = vmatprep.subr.mxu0 0.0
    %355 = vmatpush1.msra.mxu0 %v246
    %356 = vmatprep.subr.mxu0 0.0
    %357 = vmatpush1.msra.mxu0 0.0
    %358 = vmatprep.subr.mxu0 0.0
    %359 = vmatpush1.msra.mxu0 0.0
    %360 = vmatprep.subr.mxu0 0.0
    %361 = vmatpush1.msra.mxu0 0.0
    %362 = vmatprep.subr.mxu0 0.0
    %363 = vmatpush1.msra.mxu0 0.0
    %364 = vmatprep.subr.mxu0 0.0
    %365 = vmatpush1.msra.mxu0 0.0
    %366 = vmatprep.subr.mxu0 0.0
    %367 = vmatpush1.msra.mxu0 0.0
    %368 = vmatprep.subr.mxu0 0.0
    %369 = vmatpush1.msra.mxu0 0.0
    %370 = vmatprep.subr.mxu0 0.0
    %371 = vmatpush1.msra.mxu0 0.0
    %372 = vmatprep.subr.mxu0 0.0
    %373 = vmatpush1.msra.mxu0 0.0
    %374 = vmatprep.subr.mxu0 0.0
    %375 = vmatpush1.msra.mxu0 0.0
    %376 = vmatprep.subr.mxu0 0.0
    %377 = vmatpush1.msra.mxu0 0.0
    %378 = vmatprep.subr.mxu0 0.0
    %379 = vmatpush1.msra.mxu0 0.0
    %380 = vmatprep.subr.mxu0 0.0
    %381 = vmatpush1.msra.mxu0 0.0
    %382 = vmatprep.subr.mxu0 0.0
    %383 = vmatpush1.msra.mxu0 0.0
    %384 = vmatprep.subr.mxu0 0.0
    %385 = vmatpush1.msra.mxu0 0.0
    %386 = vmatprep.subr.mxu0 0.0
    %387 = vmatpush1.msra.mxu0 0.0
    %388 = vmatprep.mubr.f32.mxu0 0.0
    %389 = vmatmul.mubr.f32.gmra.mrb[0].mxu0 %v198
    %v390 = vpop.f32.mrb[0].mxu0
    %v391 = vadd.f32 %v321, %v390
    %v392 = vpop.f32.mrb[0].mxu0
    %393 = vdwg.mxu0
    %vm394 = vcmask 130048
    %395 = vst.msk [vmem:[#allocation2] sm:$0xff] %vm394, %v391
    // Predicated region
    $region22: #{deep_ensemble_forward.1} parent=1 // pred_check
      _
    $region23: #{deep_ensemble_forward.1} parent=1 // pred_check_branch
      %397 = sbr.rel (0) target = $region25
    $region24: #{deep_ensemble_forward.1} parent=1 // pred_region
      %s399 = ssub.s32 128, 128
      %400 = vsyncadd [#allocation3], %s399
      %s402 = sshll.u32 [#allocation2], 4
      %s403 = int_to_ptr.vmem [resolvable:$true] %s402
      %405 = dma.vmem_to_hbm [thread:$0]  %s403, 128, %s5, [#allocation3]
    $region25: #{deep_ensemble_forward.1} parent=1 // pred_fallthru
      _
    // Predicated region
    $region26: #{deep_ensemble_forward.1} parent=1 // pred_check
      _
    $region27: #{deep_ensemble_forward.1} parent=1 // pred_check_branch
      %407 = sbr.rel (0) target = $region29
    $region28: #{deep_ensemble_forward.1} parent=1 // pred_region
      %408 = dma.done [#allocation3], 128
    $region29: #{deep_ensemble_forward.1} parent=1 // pred_fallthru
      _
    %409 = vsyncpa [#allocation3], 1

</llo_original>
